<compile_context>
chip_gen: v6e
topology: v6e:2x2x1
jax: 0.10.0
libtpu: 0.0.40
codegen_flags: <defaults>
</compile_context>

<pallas_src>
import functools

import jax
import jax.numpy as jnp
from jax.experimental import pallas as pl
from jax.experimental.pallas import tpu as pltpu


def _round_up(x: int, m: int) -> int:
    return ((x + m - 1) // m) * m


def _linear_kernel_single(x_ref, w_ref, b_ref, o_ref):
    # x_ref: (tb, Dp), w_ref: (Dp, Cp), b_ref: (1, Cp), o_ref: (tb, Cp).
    acc = jnp.dot(x_ref[...], w_ref[...], preferred_element_type=jnp.float32)
    o_ref[...] = (acc + b_ref[...].astype(jnp.float32)).astype(o_ref.dtype)


def _linear_kernel_reduce(x_ref, w_ref, b_ref, o_ref, acc_ref):
    # x_ref: (tb, tk), w_ref: (tk, Cp), b_ref: (1, Cp),
    # o_ref: (tb, Cp), acc_ref: (tb, Cp) f32 accumulator.
    k = pl.program_id(1)

    @pl.when(k == 0)
    def _():
        acc_ref[...] = jnp.zeros_like(acc_ref)

    acc_ref[...] += jnp.dot(
        x_ref[...], w_ref[...], preferred_element_type=jnp.float32
    )

    @pl.when(k == pl.num_programs(1) - 1)
    def _():
        o_ref[...] = (
            acc_ref[...] + b_ref[...].astype(jnp.float32)
        ).astype(o_ref.dtype)


@functools.partial(jax.jit, static_argnames=("tb", "tk"))
def classifier_forward(x, w, b, *, tb=None, tk=None):
    """Pallas forward pass. Returns (logits, {}) like the PyTorch module.

    x: (B, D) features, w: (D, C) weight (already transposed vs nn.Linear),
    b: (C,) bias.  Output: (B, C) logits.
    """
    B, D = x.shape
    Dw, C = w.shape
    assert D == Dw, f"feature dim mismatch: {D} vs {Dw}"
    assert b.shape[-1] == C

    dtype = x.dtype
    elt = jnp.dtype(dtype).itemsize

    # Lane-dense class dim: pad C up to a multiple of 128.
    C_pad = _round_up(max(C, 128), 128)

    # K (feature) tile: cap so large D does not blow VMEM.
    if tk is None:
        tk = min(_round_up(D, 128), 2048)
    else:
        tk = _round_up(tk, 128)
    D_pad = _round_up(D, tk)
    k_steps = D_pad // tk

    # Batch tile: target 512 rows, shrink for small batches / VMEM budget.
    if tb is None:
        tb = 512
    tb = min(_round_up(tb, 8), _round_up(B, 8))

    vmem_budget = 24 * 1024 * 1024  # safe on v5e/v6e (128 MiB) and v7x (64 MiB)

    def _vmem_bytes(tb_):
        return (
            2 * tb_ * tk * elt          # x tile, double-buffered
            + 2 * tk * C_pad * elt      # w tile, double-buffered
            + 2 * tb_ * C_pad * elt     # out tile, double-buffered
            + tb_ * C_pad * 4           # f32 accumulator scratch
            + 2 * C_pad * elt           # bias
        )

    while tb > 8 and _vmem_bytes(tb) > vmem_budget:
        tb //= 2
    tb = max(_round_up(tb, 8), 8)

    B_pad = _round_up(B, tb)

    # Zero-pad operands (zeros do not change x @ w + b on the valid part).
    x_p = x
    if (B_pad, D_pad) != (B, D):
        x_p = jnp.pad(x, ((0, B_pad - B), (0, D_pad - D)))
    w_p = w
    if (D_pad, C_pad) != (D, C):
        w_p = jnp.pad(w, ((0, D_pad - D), (0, C_pad - C)))
    b_p = b.reshape(1, C)
    if C_pad != C:
        b_p = jnp.pad(b_p, ((0, 0), (0, C_pad - C)))

    cost = pl.CostEstimate(
        flops=2 * B_pad * D_pad * C_pad,
        transcendentals=0,
        bytes_accessed=elt * (B_pad * D_pad + D_pad * C_pad + B_pad * C_pad),
    )

    if k_steps == 1:
        # Whole feature dim fits one tile: simple 1-D grid, no scratch.
        out = pl.pallas_call(
            _linear_kernel_single,
            out_shape=jax.ShapeDtypeStruct((B_pad, C_pad), dtype),
            grid=(B_pad // tb,),
            in_specs=[
                pl.BlockSpec((tb, D_pad), lambda i: (i, 0)),     # x: stream batch
                pl.BlockSpec((D_pad, C_pad), lambda i: (0, 0)),  # w: resident
                pl.BlockSpec((1, C_pad), lambda i: (0, 0)),      # bias: resident
            ],
            out_specs=pl.BlockSpec((tb, C_pad), lambda i: (i, 0)),
            compiler_params=pltpu.CompilerParams(
                dimension_semantics=("parallel",),
                vmem_limit_bytes=32 * 1024 * 1024,
            ),
            cost_estimate=cost,
        )(x_p, w_p, b_p)
    else:
        # Large feature dim: stream K with an f32 accumulator.
        out = pl.pallas_call(
            _linear_kernel_reduce,
            out_shape=jax.ShapeDtypeStruct((B_pad, C_pad), dtype),
            grid=(B_pad // tb, k_steps),
            in_specs=[
                pl.BlockSpec((tb, tk), lambda i, k: (i, k)),      # x: batch & K
                pl.BlockSpec((tk, C_pad), lambda i, k: (k, 0)),   # w: stream K
                pl.BlockSpec((1, C_pad), lambda i, k: (0, 0)),    # bias: resident
            ],
            out_specs=pl.BlockSpec((tb, C_pad), lambda i, k: (i, 0)),
            scratch_shapes=[pltpu.VMEM((tb, C_pad), jnp.float32)],
            compiler_params=pltpu.CompilerParams(
                dimension_semantics=("parallel", "arbitrary"),
                vmem_limit_bytes=32 * 1024 * 1024,
            ),
            cost_estimate=cost,
        )(x_p, w_p, b_p)

    logits = out[:B, :C]
    return logits, {}


if __name__ == "__main__":
    key = jax.random.PRNGKey(0)

    # ---- Test 1: small aligned shape (single-K-step path) ----------------
    batch, feat_dim, num_classes = 8, 128, 16
    kx, kw, kb, key = jax.random.split(key, 4)

    x = jax.random.normal(kx, (batch, feat_dim), dtype=jnp.float32)
    w = jax.random.normal(kw, (feat_dim, num_classes), dtype=jnp.float32) * (
        1.0 / jnp.sqrt(feat_dim)
    )
    b = jax.random.normal(kb, (num_classes,), dtype=jnp.float32) * 0.01

    logits, extras = classifier_forward(x, w, b)
    logits = jax.block_until_ready(logits)

    ref = x @ w + b[None, :]
    assert logits.shape == (batch, num_classes)
    assert extras == {}
    assert jnp.allclose(logits, ref, atol=1e-5, rtol=1e-5)

    # ---- Test 2: ragged batch / feature / class dims (padding path) ------
    batch2, feat2, classes2 = 10, 200, 10
    kx2, kw2, kb2, key = jax.random.split(key, 4)
    x2 = jax.random.normal(kx2, (batch2, feat2), dtype=jnp.float32)
    w2 = jax.random.normal(kw2, (feat2, classes2), dtype=jnp.float32) * (
        1.0 / jnp.sqrt(feat2)
    )
    b2 = jax.random.normal(kb2, (classes2,), dtype=jnp.float32) * 0.01

    logits2, extras2 = classifier_forward(x2, w2, b2)
    logits2 = jax.block_until_ready(logits2)

    ref2 = x2 @ w2 + b2[None, :]
    assert logits2.shape == (batch2, classes2)
    assert extras2 == {}
    assert jnp.allclose(logits2, ref2, atol=1e-4, rtol=1e-4)

    # ---- Test 3: multi-K-step reduction path (small shapes, forced tk) ---
    batch3, feat3, classes3 = 4, 256, 12
    kx3, kw3, kb3 = jax.random.split(key, 3)
    x3 = jax.random.normal(kx3, (batch3, feat3), dtype=jnp.float32)
    w3 = jax.random.normal(kw3, (feat3, classes3), dtype=jnp.float32) * (
        1.0 / jnp.sqrt(feat3)
    )
    b3 = jax.random.normal(kb3, (classes3,), dtype=jnp.float32) * 0.01

    logits3, extras3 = classifier_forward(x3, w3, b3, tk=128)
    logits3 = jax.block_until_ready(logits3)

    ref3 = x3 @ w3 + b3[None, :]
    assert logits3.shape == (batch3, classes3)
    assert extras3 == {}
    assert jnp.allclose(logits3, ref3, atol=1e-4, rtol=1e-4)

    print("KERNEL_OK")
</pallas_src>

<mosaic_0001>
module attributes {stable_mosaic.version = 11 : i64} {
  func.func @_linear_kernel_single(%arg0: i32, %arg1: memref<8x128xf32, #tpu.memory_space<vmem>>, %arg2: memref<128x128xf32, #tpu.memory_space<vmem>>, %arg3: memref<1x128xf32, #tpu.memory_space<vmem>>, %arg4: memref<8x128xf32, #tpu.memory_space<vmem>>) attributes {dimension_semantics = [#tpu.dimension_semantics<parallel>], iteration_bounds = array<i64: 1>, scalar_prefetch = 0 : i64, scratch_operands = 0 : i64, tpu.core_type = #tpu.core_type<tc>, window_params = [{transform_indices = @transform_0, window_bounds = array<i64: 8, 128>}, {pipeline_mode = #tpu.pipeline_mode<synchronous>, transform_indices = @transform_1, window_bounds = array<i64: 128, 128>}, {pipeline_mode = #tpu.pipeline_mode<synchronous>, transform_indices = @transform_2, window_bounds = array<i64: 1, 128>}, {transform_indices = @transform_3, window_bounds = array<i64: 8, 128>}]} {
    %c0 = arith.constant 0 : index
    %c0_0 = arith.constant 0 : index
    %0 = vector.load %arg1[%c0, %c0_0] : memref<8x128xf32, #tpu.memory_space<vmem>>, vector<8x128xf32>
    %c0_1 = arith.constant 0 : index
    %c0_2 = arith.constant 0 : index
    %1 = vector.load %arg2[%c0_1, %c0_2] : memref<128x128xf32, #tpu.memory_space<vmem>>, vector<128x128xf32>
    %cst = arith.constant dense<0.000000e+00> : vector<8x128xf32>
    %2 = tpu.matmul %0, %1, %cst {dimension_numbers = #tpu.dot_dimension_numbers<[1], [0], [0], [1], [0, 0, 1, 1], [], []>} : vector<8x128xf32>, vector<128x128xf32>, vector<8x128xf32> -> vector<8x128xf32>
    %c0_3 = arith.constant 0 : index
    %c0_4 = arith.constant 0 : index
    %3 = vector.load %arg3[%c0_3, %c0_4] : memref<1x128xf32, #tpu.memory_space<vmem>>, vector<1x128xf32>
    %4 = vector.broadcast %3 : vector<1x128xf32> to vector<8x128xf32>
    %5 = arith.addf %2, %4 : vector<8x128xf32>
    %c0_5 = arith.constant 0 : index
    %c0_6 = arith.constant 0 : index
    %6 = vector.load %arg4[%c0_5, %c0_6] : memref<8x128xf32, #tpu.memory_space<vmem>>, vector<8x128xf32>
    tpu.vector_store %arg4[%c0_5, %c0_6], %5 {strides = array<i32>} : memref<8x128xf32, #tpu.memory_space<vmem>>, vector<8x128xf32>,
    return
  }
  func.func @transform_0(%arg0: i32) -> (i32, i32) {
    %c0_i32 = arith.constant 0 : i32
    %c0_i32_0 = arith.constant 0 : i32
    return %arg0, %c0_i32 : i32, i32
  }
  func.func @transform_1(%arg0: i32) -> (i32, i32) {
    %c0_i32 = arith.constant 0 : i32
    %c0_i32_0 = arith.constant 0 : i32
    %c0_i32_1 = arith.constant 0 : i32
    return %c0_i32, %c0_i32_0 : i32, i32
  }
  func.func @transform_2(%arg0: i32) -> (i32, i32) {
    %c0_i32 = arith.constant 0 : i32
    %c0_i32_0 = arith.constant 0 : i32
    %c0_i32_1 = arith.constant 0 : i32
    return %c0_i32, %c0_i32_0 : i32, i32
  }
  func.func @transform_3(%arg0: i32) -> (i32, i32) {
    %c0_i32 = arith.constant 0 : i32
    %c0_i32_0 = arith.constant 0 : i32
    return %arg0, %c0_i32 : i32, i32
  }
}

</mosaic_0001>

<llo_original>
// kernel: classifier_forward.1
$region0: #{classifier_forward.1}
  #allocation0 [shape = 'u32[]', space=smem, size = 0x4, offset = 0x4, fixed_abs, tag = 'smem constant byte address 0x4 - core index']
  #allocation1 [shape = 'u32[144,128]{1,0:T(1,128)}', space=vmem, size = 0x12000, scoped, tag = 'internal scratch']
  %s0 = inlined_call_operand.vmem [shape: f32[8,128], index: 0, kind: input, shape index: {}]
  %s1 = inlined_call_operand.vmem [shape: f32[128,128], index: 1, kind: input, shape index: {}]
  %s2 = inlined_call_operand.vmem [shape: f32[1,128], index: 2, kind: input, shape index: {}]
  %s3 = inlined_call_operand.hbm [shape: f32[8,128], index: 3, kind: output, shape index: {}]
  %s4 = sld [smem:[#allocation0]]
  $region22: #{classifier_forward.1} parent=0
    _
  %s6 = ssub.s32 1, %s4
  %s7 = scalar_select 0, %s6, %s4
  $region1: #{classifier_forward.1} parent=0
    #allocation2 [shape = 'u8[4096]{0}', space=vmem, size = 0x1000, scoped, tag = 'output window, operand 0, single buffered']
    #allocation3 [shape = 's32[1]{0}', space=sflag, size = 0x4, scoped, tag = 'scoped memory for classifier_forward.1']
    %8 = vsyncpa [#allocation3], 0
    // Predicated region
    $region2: #{classifier_forward.1} parent=1 // pred_check
      _
    $region3: #{classifier_forward.1} parent=1 // pred_check_branch
      %10 = sbr.rel (0) target = $region5
    $region4: #{classifier_forward.1} parent=1 // pred_region
      _
    $region5: #{classifier_forward.1} parent=1 // pred_fallthru
      _
    // Predicated region
    $region6: #{classifier_forward.1} parent=1 // pred_check
      _
    $region7: #{classifier_forward.1} parent=1 // pred_check_branch
      %12 = sbr.rel (0) target = $region9
    $region8: #{classifier_forward.1} parent=1 // pred_region
      _
    $region9: #{classifier_forward.1} parent=1 // pred_fallthru
      _
    // Predicated region
    $region10: #{classifier_forward.1} parent=1 // pred_check
      _
    $region11: #{classifier_forward.1} parent=1 // pred_check_branch
      %14 = sbr.rel (0) target = $region13
    $region12: #{classifier_forward.1} parent=1 // pred_region
      _
    $region13: #{classifier_forward.1} parent=1 // pred_fallthru
      _
    %v15 = vld [vmem:[%s0] sm:$0xff]
    %v16 = vld [vmem:[%s1] sm:$0xff]
    %v17 = vld [vmem:[%s1 + $0x8] sm:$0xff]
    %v18 = vld [vmem:[%s1 + $0x10] sm:$0xff]
    %v19 = vld [vmem:[%s1 + $0x18] sm:$0xff]
    %v20 = vld [vmem:[%s1 + $0x20] sm:$0xff]
    %v21 = vld [vmem:[%s1 + $0x28] sm:$0xff]
    %v22 = vld [vmem:[%s1 + $0x30] sm:$0xff]
    %v23 = vld [vmem:[%s1 + $0x38] sm:$0xff]
    %v24 = vld [vmem:[%s1 + $0x40] sm:$0xff]
    %v25 = vld [vmem:[%s1 + $0x48] sm:$0xff]
    %v26 = vld [vmem:[%s1 + $0x50] sm:$0xff]
    %v27 = vld [vmem:[%s1 + $0x58] sm:$0xff]
    %v28 = vld [vmem:[%s1 + $0x60] sm:$0xff]
    %v29 = vld [vmem:[%s1 + $0x68] sm:$0xff]
    %v30 = vld [vmem:[%s1 + $0x70] sm:$0xff]
    %v31 = vld [vmem:[%s1 + $0x78] sm:$0xff]
    %v32 = vld [vmem:[%s2] sm:$0x1]
    %v34 = vlaneseq
    %v35 = vshrl.u32 %v34, 7
    %v36 = vsub.s32 0, %v35
    %v37 = vrot.slane %v32, %v36
    %39 = vmatprep.subr.mxu0 0.0
    %40 = vmatpush1.msra.mxu0 %v31
    %41 = vmatprep.subr.mxu0 0.0
    %42 = vmatpush1.msra.mxu0 %v30
    %43 = vmatprep.subr.mxu0 0.0
    %44 = vmatpush1.msra.mxu0 %v29
    %45 = vmatprep.subr.mxu0 0.0
    %46 = vmatpush1.msra.mxu0 %v28
    %47 = vmatprep.subr.mxu0 0.0
    %48 = vmatpush1.msra.mxu0 %v27
    %49 = vmatprep.subr.mxu0 0.0
    %50 = vmatpush1.msra.mxu0 %v26
    %51 = vmatprep.subr.mxu0 0.0
    %52 = vmatpush1.msra.mxu0 %v25
    %53 = vmatprep.subr.mxu0 0.0
    %54 = vmatpush1.msra.mxu0 %v24
    %55 = vmatprep.subr.mxu0 0.0
    %56 = vmatpush1.msra.mxu0 %v23
    %57 = vmatprep.subr.mxu0 0.0
    %58 = vmatpush1.msra.mxu0 %v22
    %59 = vmatprep.subr.mxu0 0.0
    %60 = vmatpush1.msra.mxu0 %v21
    %61 = vmatprep.subr.mxu0 0.0
    %62 = vmatpush1.msra.mxu0 %v20
    %63 = vmatprep.subr.mxu0 0.0
    %64 = vmatpush1.msra.mxu0 %v19
    %65 = vmatprep.subr.mxu0 0.0
    %66 = vmatpush1.msra.mxu0 %v18
    %67 = vmatprep.subr.mxu0 0.0
    %68 = vmatpush1.msra.mxu0 %v17
    %69 = vmatprep.subr.mxu0 0.0
    %70 = vmatpush1.msra.mxu0 %v16
    %71 = vmatprep.subr.mxu0 0.0
    %72 = vmatpush2.msra.mxu0 0.0
    %73 = vmatprep.subr.mxu0 0.0
    %74 = vmatpush2.msra.mxu0 0.0
    %75 = vmatprep.subr.mxu0 0.0
    %76 = vmatpush2.msra.mxu0 0.0
    %77 = vmatprep.subr.mxu0 0.0
    %78 = vmatpush2.msra.mxu0 0.0
    %79 = vmatprep.subr.mxu0 0.0
    %80 = vmatpush2.msra.mxu0 0.0
    %81 = vmatprep.subr.mxu0 0.0
    %82 = vmatpush2.msra.mxu0 0.0
    %83 = vmatprep.subr.mxu0 0.0
    %84 = vmatpush2.msra.mxu0 0.0
    %85 = vmatprep.subr.mxu0 0.0
    %86 = vmatpush2.msra.mxu0 0.0
    %87 = vmatprep.subr.mxu0 0.0
    %88 = vmatpush2.msra.mxu0 0.0
    %89 = vmatprep.subr.mxu0 0.0
    %90 = vmatpush2.msra.mxu0 0.0
    %91 = vmatprep.subr.mxu0 0.0
    %92 = vmatpush2.msra.mxu0 0.0
    %93 = vmatprep.subr.mxu0 0.0
    %94 = vmatpush2.msra.mxu0 0.0
    %95 = vmatprep.subr.mxu0 0.0
    %96 = vmatpush2.msra.mxu0 0.0
    %97 = vmatprep.subr.mxu0 0.0
    %98 = vmatpush2.msra.mxu0 0.0
    %99 = vmatprep.subr.mxu0 0.0
    %100 = vmatpush2.msra.mxu0 0.0
    %101 = vmatprep.subr.mxu0 0.0
    %102 = vmatpush2.msra.mxu0 0.0
    %103 = vmatprep.mubr.f32.mxu0 0.0
    %104 = vmatmul.mubr.f32.gmra.mxu0 %v15
    %v105 = vpop.f32.mrf.mxu0
    %v106 = vadd.f32 %v37, %v105
    %v107 = vpop.f32.mrf.mxu0
    %108 = vdwg.mxu0
    %109 = vst [vmem:[#allocation2] sm:$0xff] %v106
    // Predicated region
    $region14: #{classifier_forward.1} parent=1 // pred_check
      _
    $region15: #{classifier_forward.1} parent=1 // pred_check_branch
      %111 = sbr.rel (0) target = $region17
    $region16: #{classifier_forward.1} parent=1 // pred_region
      %s113 = ssub.s32 128, 128
      %114 = vsyncadd [#allocation3], %s113
      %s116 = sshll.u32 [#allocation2], 4
      %s117 = int_to_ptr.vmem [resolvable:$true] %s116
      %119 = dma.vmem_to_hbm [thread:$0]  %s117, 128, %s3, [#allocation3]
    $region17: #{classifier_forward.1} parent=1 // pred_fallthru
      _
    // Predicated region
    $region18: #{classifier_forward.1} parent=1 // pred_check
      _
    $region19: #{classifier_forward.1} parent=1 // pred_check_branch
      %121 = sbr.rel (0) target = $region21
    $region20: #{classifier_forward.1} parent=1 // pred_region
      %122 = dma.done [#allocation3], 128
    $region21: #{classifier_forward.1} parent=1 // pred_fallthru
      _
    %123 = vsyncpa [#allocation3], 1

</llo_original>
